<compile_context>
chip_gen: v7x
topology: tpu7x:2x2x1
jax: 0.10.0
libtpu: 0.0.40
codegen_flags: <defaults>
</compile_context>

<pallas_src>
import math
import functools

import jax
import jax.numpy as jnp
from jax.experimental import pallas as pl
from jax.experimental.pallas import tpu as pltpu

F32 = jnp.float32
BF16 = jnp.bfloat16


def _round_up(x, m):
    return (x + m - 1) // m * m


def _silu(x):
    return x * (1.0 / (1.0 + jnp.exp(-x)))


# ----------------------------------------------------------------------------
# Matmul kernels (bf16 MXU operands, f32 accumulation, fused epilogues)
# ----------------------------------------------------------------------------

def _mm_kernel(a_ref, b_ref, bias_ref, o_ref, acc_ref, *, act):
    @pl.when(pl.program_id(2) == 0)
    def _():
        acc_ref[...] = jnp.zeros_like(acc_ref)

    acc_ref[...] += jnp.dot(a_ref[...].astype(BF16),
                            b_ref[...].astype(BF16),
                            preferred_element_type=jnp.float32)

    @pl.when(pl.program_id(2) == pl.num_programs(2) - 1)
    def _():
        r = acc_ref[...] + bias_ref[...]
        if act == "silu":
            r = _silu(r)
        o_ref[...] = r.astype(o_ref.dtype)


def _pick_tiles(M, K, N):
    tm = _round_up(M, 8) if M <= 512 else 256
    tk = 512 if K % 512 == 0 else (256 if K % 256 == 0 else 128)
    tn = 256 if N % 256 == 0 else (128 if N % 128 == 0 else _round_up(min(N, 128), 128))
    return tm, tk, tn


@functools.partial(jax.jit, static_argnames=("act",))
def _matmul_impl(a, w, bias, act):
    M, K = a.shape
    _, N = w.shape
    tm, tk, tn = _pick_tiles(M, K, N)
    Mp, Kp, Np = _round_up(M, tm), _round_up(K, tk), _round_up(N, tn)

    # Only pad when actually needed (most shapes in this model are aligned).
    a_p = a if (Mp == M and Kp == K) else \
        jnp.zeros((Mp, Kp), a.dtype).at[:M, :K].set(a)
    w_p = w if (Kp == K and Np == N) else \
        jnp.zeros((Kp, Np), w.dtype).at[:K, :N].set(w)
    b_p = bias.reshape(1, N) if Np == N else \
        jnp.zeros((1, Np), F32).at[0, :N].set(bias.astype(F32))

    grid = (Mp // tm, Np // tn, Kp // tk)
    out = pl.pallas_call(
        functools.partial(_mm_kernel, act=act),
        out_shape=jax.ShapeDtypeStruct((Mp, Np), F32),
        grid=grid,
        in_specs=[
            pl.BlockSpec((tm, tk), lambda i, j, k: (i, k)),
            pl.BlockSpec((tk, tn), lambda i, j, k: (k, j)),
            pl.BlockSpec((1, tn), lambda i, j, k: (0, j)),
        ],
        out_specs=pl.BlockSpec((tm, tn), lambda i, j, k: (i, j)),
        scratch_shapes=[pltpu.VMEM((tm, tn), jnp.float32)],
        compiler_params=pltpu.CompilerParams(
            dimension_semantics=("parallel", "parallel", "arbitrary")),
    )(a_p, w_p, b_p)
    if Mp == M and Np == N:
        return out
    return out[:M, :N]


def matmul(a, w, bias=None, act=None):
    if bias is None:
        bias = jnp.zeros((w.shape[1],), F32)
    return _matmul_impl(a, w, bias, act=act)


def _mm_geglu_kernel(a_ref, wa_ref, wg_ref, ba_ref, bg_ref, o_ref,
                     acca_ref, accg_ref):
    @pl.when(pl.program_id(2) == 0)
    def _():
        acca_ref[...] = jnp.zeros_like(acca_ref)
        accg_ref[...] = jnp.zeros_like(accg_ref)

    a = a_ref[...].astype(BF16)
    acca_ref[...] += jnp.dot(a, wa_ref[...].astype(BF16),
                             preferred_element_type=jnp.float32)
    accg_ref[...] += jnp.dot(a, wg_ref[...].astype(BF16),
                             preferred_element_type=jnp.float32)

    @pl.when(pl.program_id(2) == pl.num_programs(2) - 1)
    def _():
        va = acca_ref[...] + ba_ref[...]
        g = accg_ref[...] + bg_ref[...]
        # TODO(synk): PyTorch F.gelu default is the exact erf-GELU; using the tanh
        # approximation in-kernel since erf lowering is not guaranteed in Mosaic.
        c = math.sqrt(2.0 / math.pi)
        gelu_g = 0.5 * g * (1.0 + jnp.tanh(c * (g + 0.044715 * g * g * g)))
        o_ref[...] = (va * gelu_g).astype(o_ref.dtype)


@jax.jit
def matmul_geglu(a, wa, wg, ba, bg):
    M, K = a.shape
    N = wa.shape[1]
    tm, tk, tn = _pick_tiles(M, K, N)
    Mp, Kp, Np = _round_up(M, tm), _round_up(K, tk), _round_up(N, tn)

    a_p = a if (Mp == M and Kp == K) else \
        jnp.zeros((Mp, Kp), a.dtype).at[:M, :K].set(a)
    wa_p = wa if (Kp == K and Np == N) else \
        jnp.zeros((Kp, Np), wa.dtype).at[:K, :N].set(wa)
    wg_p = wg if (Kp == K and Np == N) else \
        jnp.zeros((Kp, Np), wg.dtype).at[:K, :N].set(wg)
    ba_p = ba.reshape(1, N) if Np == N else \
        jnp.zeros((1, Np), F32).at[0, :N].set(ba)
    bg_p = bg.reshape(1, N) if Np == N else \
        jnp.zeros((1, Np), F32).at[0, :N].set(bg)

    grid = (Mp // tm, Np // tn, Kp // tk)
    out = pl.pallas_call(
        _mm_geglu_kernel,
        out_shape=jax.ShapeDtypeStruct((Mp, Np), F32),
        grid=grid,
        in_specs=[
            pl.BlockSpec((tm, tk), lambda i, j, k: (i, k)),
            pl.BlockSpec((tk, tn), lambda i, j, k: (k, j)),
            pl.BlockSpec((tk, tn), lambda i, j, k: (k, j)),
            pl.BlockSpec((1, tn), lambda i, j, k: (0, j)),
            pl.BlockSpec((1, tn), lambda i, j, k: (0, j)),
        ],
        out_specs=pl.BlockSpec((tm, tn), lambda i, j, k: (i, j)),
        scratch_shapes=[pltpu.VMEM((tm, tn), jnp.float32),
                        pltpu.VMEM((tm, tn), jnp.float32)],
        compiler_params=pltpu.CompilerParams(
            dimension_semantics=("parallel", "parallel", "arbitrary")),
    )(a_p, wa_p, wg_p, ba_p, bg_p)
    if Mp == M and Np == N:
        return out
    return out[:M, :N]


# ----------------------------------------------------------------------------
# Fused 3x3 convolution (stride 1): 9 shifted tap matmuls, f32 VMEM accumulator
# ----------------------------------------------------------------------------

def _conv3x3_kernel(x_ref, w_ref, b_ref, o_ref, acc_ref, *, H, W):
    acc_ref[...] = jnp.zeros_like(acc_ref)
    for t in range(9):
        kh, kw = divmod(t, 3)
        xt = x_ref[0, kh:kh + H, kw:kw + W, :]            # (H, W, Cin) window
        xt = xt.reshape(H * W, xt.shape[-1]).astype(BF16)
        acc_ref[...] += jnp.dot(xt, w_ref[t].astype(BF16),
                                preferred_element_type=jnp.float32)
    o_ref[0] = acc_ref[...] + b_ref[...]


@jax.jit
def _conv3x3_fused(x, w9, bias):
    B, H, W, Cin = x.shape
    Cout = w9.shape[-1]
    xp = jnp.pad(x.astype(F32), ((0, 0), (1, 1), (1, 1), (0, 0)))
    out = pl.pallas_call(
        functools.partial(_conv3x3_kernel, H=H, W=W),
        out_shape=jax.ShapeDtypeStruct((B, H * W, Cout), F32),
        grid=(B,),
        in_specs=[
            pl.BlockSpec((1, H + 2, W + 2, Cin), lambda b: (b, 0, 0, 0)),
            pl.BlockSpec((9, Cin, Cout), lambda b: (0, 0, 0)),
            pl.BlockSpec((1, Cout), lambda b: (0, 0)),
        ],
        out_specs=pl.BlockSpec((1, H * W, Cout), lambda b: (b, 0, 0)),
        scratch_shapes=[pltpu.VMEM((H * W, Cout), jnp.float32)],
        compiler_params=pltpu.CompilerParams(
            dimension_semantics=("parallel",),
            vmem_limit_bytes=32 * 1024 * 1024),
    )(xp, w9, bias.reshape(1, Cout).astype(F32))
    return out.reshape(B, H, W, Cout)


_fused_conv_ok = None


def _fused_conv_available():
    global _fused_conv_ok
    if _fused_conv_ok is None:
        try:
            xx = jnp.ones((1, 8, 8, 128), F32)
            ww = jnp.ones((9, 128, 128), BF16) * 0.01
            bb = jnp.zeros((128,), F32)
            jax.block_until_ready(_conv3x3_fused(xx, ww, bb))
            _fused_conv_ok = True
        except Exception:
            _fused_conv_ok = False
    return _fused_conv_ok


def im2col(x, stride=1):
    B, H, W, C = x.shape
    Ho = (H + 2 - 3) // stride + 1
    Wo = (W + 2 - 3) // stride + 1
    xp = jnp.pad(x, ((0, 0), (1, 1), (1, 1), (0, 0)))
    cols = []
    for kh in range(3):
        for kw in range(3):
            cols.append(xp[:, kh:kh + stride * (Ho - 1) + 1:stride,
                           kw:kw + stride * (Wo - 1) + 1:stride, :])
    patches = jnp.stack(cols, axis=3)          # (B, Ho, Wo, 9, C)
    return patches.reshape(B * Ho * Wo, 9 * C), Ho, Wo


def conv3x3(x, p, stride=1):
    B, H, W, Cin = x.shape
    cout = p["w"].shape[-1]
    if (stride == 1 and W % 8 == 0 and Cin % 128 == 0 and cout % 128 == 0
            and _fused_conv_available()):
        return _conv3x3_fused(x, p["w"], p["b"])
    cols, Ho, Wo = im2col(x, stride)
    y = matmul(cols, p["w"].reshape(9 * Cin, cout), p["b"])
    return y.reshape(B, Ho, Wo, cout)


def conv1x1(x, p):
    B, H, W, C = x.shape
    cout = p["w"].shape[1]
    y = matmul(x.reshape(B * H * W, C), p["w"], p["b"])
    return y.reshape(B, H, W, cout)


# ----------------------------------------------------------------------------
# GroupNorm (two-pass) with fused (1+scale)*y+shift and SiLU epilogue
# ----------------------------------------------------------------------------

def _gn_kernel(x_ref, g_ref, b_ref, sc_ref, sh_ref, gmap_ref, gmapT_ref, o_ref,
               *, eps, n, silu):
    x = x_ref[0]                                  # (HW, C)
    s = jnp.sum(x, axis=0, keepdims=True)         # (1, C)
    mean_g = jnp.dot(s, gmap_ref[...], preferred_element_type=jnp.float32) / n
    mean_c = jnp.dot(mean_g, gmapT_ref[...], preferred_element_type=jnp.float32)
    d = x - mean_c
    sq = jnp.sum(d * d, axis=0, keepdims=True)
    var_g = jnp.dot(sq, gmap_ref[...], preferred_element_type=jnp.float32) / n
    inv_c = jnp.dot(jax.lax.rsqrt(var_g + eps), gmapT_ref[...],
                    preferred_element_type=jnp.float32)
    y = d * inv_c * g_ref[...] + b_ref[...]
    y = y * (1.0 + sc_ref[0]) + sh_ref[0]
    if silu:
        y = _silu(y)
    o_ref[0] = y


@functools.partial(jax.jit, static_argnames=("groups", "eps", "silu"))
def _groupnorm_impl(x, gamma, beta, scale, shift, groups, eps, silu):
    B, H, W, C = x.shape
    HW = H * W
    G = groups
    Cg = C // G
    gmap = jnp.repeat(jnp.eye(G, dtype=F32), Cg, axis=0)   # (C, G) channel->group
    out = pl.pallas_call(
        functools.partial(_gn_kernel, eps=eps, n=float(HW * Cg), silu=silu),
        out_shape=jax.ShapeDtypeStruct((B, HW, C), F32),
        grid=(B,),
        in_specs=[
            pl.BlockSpec((1, HW, C), lambda b: (b, 0, 0)),
            pl.BlockSpec((1, C), lambda b: (0, 0)),
            pl.BlockSpec((1, C), lambda b: (0, 0)),
            pl.BlockSpec((1, 1, C), lambda b: (b, 0, 0)),
            pl.BlockSpec((1, 1, C), lambda b: (b, 0, 0)),
            pl.BlockSpec((C, G), lambda b: (0, 0)),
            pl.BlockSpec((G, C), lambda b: (0, 0)),
        ],
        out_specs=pl.BlockSpec((1, HW, C), lambda b: (b, 0, 0)),
        compiler_params=pltpu.CompilerParams(dimension_semantics=("parallel",)),
    )(x.reshape(B, HW, C), gamma.reshape(1, C), beta.reshape(1, C),
      scale.reshape(B, 1, C), shift.reshape(B, 1, C), gmap, gmap.T)
    return out.reshape(B, H, W, C)


def groupnorm(x, gamma, beta, scale=None, shift=None, groups=32, eps=1e-5,
              silu=False):
    B = x.shape[0]
    C = x.shape[-1]
    if scale is None:
        scale = jnp.zeros((B, C), F32)
        shift = jnp.zeros((B, C), F32)
    return _groupnorm_impl(x, gamma, beta, scale, shift,
                           groups=groups, eps=eps, silu=silu)


# ----------------------------------------------------------------------------
# LayerNorm (row-tiled)
# ----------------------------------------------------------------------------

def _ln_kernel(x_ref, g_ref, b_ref, o_ref, *, eps):
    x = x_ref[...]
    mu = jnp.mean(x, axis=-1, keepdims=True)
    d = x - mu
    var = jnp.mean(d * d, axis=-1, keepdims=True)
    o_ref[...] = d * jax.lax.rsqrt(var + eps) * g_ref[...] + b_ref[...]


@jax.jit
def layernorm(x, gamma, beta):
    B, N, C = x.shape
    rows = B * N
    x2 = x.reshape(rows, C)
    tm = rows if rows <= 256 else 256
    rows_p = _round_up(rows, tm)
    if rows_p != rows:
        x2 = jnp.zeros((rows_p, C), F32).at[:rows].set(x2)
    out = pl.pallas_call(
        functools.partial(_ln_kernel, eps=1e-5),
        out_shape=jax.ShapeDtypeStruct((rows_p, C), F32),
        grid=(rows_p // tm,),
        in_specs=[pl.BlockSpec((tm, C), lambda i: (i, 0)),
                  pl.BlockSpec((1, C), lambda i: (0, 0)),
                  pl.BlockSpec((1, C), lambda i: (0, 0))],
        out_specs=pl.BlockSpec((tm, C), lambda i: (i, 0)),
        compiler_params=pltpu.CompilerParams(dimension_semantics=("parallel",)),
    )(x2, gamma.reshape(1, C), beta.reshape(1, C))
    return out[:rows].reshape(B, N, C)


# ----------------------------------------------------------------------------
# SiLU (tiny, used once on the time embedding)
# ----------------------------------------------------------------------------

def _silu_kernel(x_ref, o_ref):
    o_ref[...] = _silu(x_ref[...])


@jax.jit
def silu2d(x):
    return pl.pallas_call(
        _silu_kernel, out_shape=jax.ShapeDtypeStruct(x.shape, F32))(x)


# ----------------------------------------------------------------------------
# Attention: lane-dense kernel (grid per batch, heads looped in-kernel)
# ----------------------------------------------------------------------------

def _attn_dense_kernel(q_ref, k_ref, v_ref, *rest, heads, scale, use_mask):
    if use_mask:
        m_ref, o_ref = rest
    else:
        (o_ref,) = rest
    q = q_ref[0]          # (N, C)
    k = k_ref[0]          # (T, C)
    v = v_ref[0]          # (T, C)
    C = q.shape[-1]
    d = C // heads
    neg = -jnp.finfo(jnp.float32).max
    outs = []
    for h in range(heads):
        qh = q[:, h * d:(h + 1) * d]
        kh = k[:, h * d:(h + 1) * d]
        vh = v[:, h * d:(h + 1) * d]
        s = jax.lax.dot_general(qh, kh, (((1,), (1,)), ((), ())),
                                preferred_element_type=jnp.float32) * scale
        if use_mask:
            s = jnp.where(m_ref[0] > 0.5, s, neg)
        s = s - jnp.max(s, axis=-1, keepdims=True)
        p = jnp.exp(s)
        p = p * pl.reciprocal(jnp.sum(p, axis=-1, keepdims=True), approx=True)
        outs.append(jnp.dot(p, vh, preferred_element_type=jnp.float32))
    o_ref[0] = jnp.concatenate(outs, axis=-1)


@functools.partial(jax.jit, static_argnames=("heads", "scale", "use_mask"))
def _attention_dense(q, k, v, mask, heads, scale, use_mask):
    B, N, C = q.shape
    T = k.shape[1]
    in_specs = [pl.BlockSpec((1, N, C), lambda b: (b, 0, 0)),
                pl.BlockSpec((1, T, C), lambda b: (b, 0, 0)),
                pl.BlockSpec((1, T, C), lambda b: (b, 0, 0))]
    args = [q, k, v]
    if use_mask:
        in_specs.append(pl.BlockSpec((1, 1, T), lambda b: (b, 0, 0)))
        args.append(mask.reshape(B, 1, T).astype(F32))
    return pl.pallas_call(
        functools.partial(_attn_dense_kernel, heads=heads, scale=scale,
                          use_mask=use_mask),
        out_shape=jax.ShapeDtypeStruct((B, N, C), F32),
        grid=(B,),
        in_specs=in_specs,
        out_specs=pl.BlockSpec((1, N, C), lambda b: (b, 0, 0)),
        compiler_params=pltpu.CompilerParams(dimension_semantics=("parallel",)),
    )(*args)


# --- fallback: per-(batch*head) kernel (old layout; known to lower) ----------

def _attn_bh_kernel(q_ref, k_ref, v_ref, m_ref, o_ref, *, scale):
    q = q_ref[0]
    k = k_ref[0]
    v = v_ref[0]
    m = m_ref[0]
    s = jax.lax.dot_general(q, k, (((1,), (1,)), ((), ())),
                            preferred_element_type=jnp.float32) * scale
    s = jnp.where(m > 0.5, s, -jnp.finfo(jnp.float32).max)
    s = s - jnp.max(s, axis=-1, keepdims=True)
    p = jnp.exp(s)
    p = p * pl.reciprocal(jnp.sum(p, axis=-1, keepdims=True), approx=True)
    o_ref[0] = jnp.dot(p, v, preferred_element_type=jnp.float32)


@functools.partial(jax.jit, static_argnames=("heads", "scale"))
def _attention_bh(q, k, v, mask, heads, scale):
    B, N, C = q.shape
    T = k.shape[1]
    d = C // heads
    qh = q.reshape(B, N, heads, d).transpose(0, 2, 1, 3).reshape(B * heads, N, d)
    kh = k.reshape(B, T, heads, d).transpose(0, 2, 1, 3).reshape(B * heads, T, d)
    vh = v.reshape(B, T, heads, d).transpose(0, 2, 1, 3).reshape(B * heads, T, d)
    if mask is None:
        mask = jnp.ones((B, T), F32)
    m3 = mask.reshape(B, 1, T).astype(F32)
    o = pl.pallas_call(
        functools.partial(_attn_bh_kernel, scale=scale),
        out_shape=jax.ShapeDtypeStruct((B * heads, N, d), F32),
        grid=(B * heads,),
        in_specs=[
            pl.BlockSpec((1, N, d), lambda i: (i, 0, 0)),
            pl.BlockSpec((1, T, d), lambda i: (i, 0, 0)),
            pl.BlockSpec((1, T, d), lambda i: (i, 0, 0)),
            pl.BlockSpec((1, 1, T), lambda i: (i // heads, 0, 0)),
        ],
        out_specs=pl.BlockSpec((1, N, d), lambda i: (i, 0, 0)),
        compiler_params=pltpu.CompilerParams(dimension_semantics=("parallel",)),
    )(qh, kh, vh, m3)
    return o.reshape(B, heads, N, d).transpose(0, 2, 1, 3).reshape(B, N, C)


_attn_dense_ok = None


def _attention_dense_available():
    global _attn_dense_ok
    if _attn_dense_ok is None:
        try:
            qq = jnp.ones((1, 64, 128), F32) * 0.01
            kk = jnp.ones((1, 8, 128), F32) * 0.01
            mm = jnp.ones((1, 8), F32)
            jax.block_until_ready(
                _attention_dense(qq, kk, kk, mm, heads=8, scale=0.25, use_mask=True))
            jax.block_until_ready(
                _attention_dense(qq, qq, qq, None, heads=8, scale=0.25, use_mask=False))
            _attn_dense_ok = True
        except Exception:
            _attn_dense_ok = False
    return _attn_dense_ok


def attention(q, k, v, mask, heads, scale):
    if _attention_dense_available():
        return _attention_dense(q, k, v, mask, heads=heads, scale=scale,
                                use_mask=mask is not None)
    return _attention_bh(q, k, v, mask, heads=heads, scale=scale)


# ----------------------------------------------------------------------------
# Glue layers built on the kernels
# ----------------------------------------------------------------------------

def resblock(p, x, emb_silu):
    cout = p["conv1"]["w"].shape[-1]
    h = groupnorm(x, p["gn1"]["w"], p["gn1"]["b"], eps=1e-5, silu=True)
    h = conv3x3(h, p["conv1"])
    emb_out = matmul(emb_silu, p["emb"]["w"], p["emb"]["b"])   # (B, 2*cout)
    scale = emb_out[:, :cout]
    shift = emb_out[:, cout:]
    # fused: GN -> *(1+scale)+shift -> SiLU
    h = groupnorm(h, p["gn2"]["w"], p["gn2"]["b"], scale=scale, shift=shift,
                  eps=1e-5, silu=True)
    h = conv3x3(h, p["conv2"])                                 # zero-init conv
    if "skip" in p:
        x = conv1x1(x, p["skip"])
    return x + h


def cross_attention(p, x, text, mask, heads, dim_head):
    B, N, Dq = x.shape
    Tt, Dk = text.shape[1], text.shape[2]
    q = matmul(x.reshape(B * N, Dq), p["wq"]).reshape(B, N, -1)
    k = matmul(text.reshape(B * Tt, Dk), p["wk"]).reshape(B, Tt, -1)
    v = matmul(text.reshape(B * Tt, Dk), p["wv"]).reshape(B, Tt, -1)
    o = attention(q, k, v, mask, heads=heads, scale=float(dim_head) ** -0.5)
    o = matmul(o.reshape(B * N, -1), p["wo"], p["bo"])
    return o.reshape(B, N, Dq)


def feedforward(p, x):
    B, N, D = x.shape
    h = matmul_geglu(x.reshape(B * N, D), p["w1a"], p["w1g"], p["b1a"], p["b1g"])
    out = matmul(h, p["w2"], p["b2"])
    return out.reshape(B, N, D)


def basic_transformer_block(p, x, states, cmask, heads, dim_head):
    h = layernorm(x, p["ln1"]["w"], p["ln1"]["b"])
    x = cross_attention(p["attn1"], h, h, None, heads, dim_head) + x
    h = layernorm(x, p["ln2"]["w"], p["ln2"]["b"])
    x = cross_attention(p["attn2"], h, states, cmask, heads, dim_head) + x
    h = layernorm(x, p["ln3"]["w"], p["ln3"]["b"])
    x = feedforward(p["ff"], h) + x
    return x


def spatial_transformer(p, x, states, cmask):
    B, H, W, C = x.shape
    heads = 8
    dim_head = C // 8
    h = groupnorm(x, p["norm"]["w"], p["norm"]["b"], eps=1e-6, silu=False)
    h = conv1x1(h, p["proj_in"])
    seq = h.reshape(B, H * W, C)
    seq = basic_transformer_block(p["block"], seq, states, cmask, heads, dim_head)
    h = seq.reshape(B, H, W, C)
    h = conv1x1(h, p["proj_out"])
    return x + h


def upsample(p, x):
    x = jnp.repeat(jnp.repeat(x, 2, axis=1), 2, axis=2)   # nearest 2x
    return conv3x3(x, p["conv"])


def timestep_embedding(timesteps, dim=128, max_period=10000):
    half = dim // 2
    freqs = jnp.exp(-math.log(max_period) * jnp.arange(half, dtype=F32) / half)
    args = timesteps.astype(F32)[:, None] * freqs[None]
    return jnp.concatenate([jnp.cos(args), jnp.sin(args)], axis=-1)


# ----------------------------------------------------------------------------
# Parameter initialization (deterministic, in-script; weights pre-cast to bf16)
# ----------------------------------------------------------------------------

_param_key = jax.random.PRNGKey(0)


def _next_key():
    global _param_key
    _param_key, sub = jax.random.split(_param_key)
    return sub


def w_init(shape, std=0.02):
    return jax.random.normal(_next_key(), shape, dtype=F32) * std


def w_init_bf16(shape, std=0.02):
    return w_init(shape, std).astype(BF16)


def init_gn(c):
    return {"w": jnp.ones((c,), F32), "b": jnp.zeros((c,), F32)}


def init_conv3(cin, cout, zero=False):
    if zero:
        w = jnp.zeros((9, cin, cout), BF16)
    else:
        w = w_init((3, 3, cin, cout)).reshape(9, cin, cout).astype(BF16)
    return {"w": w, "b": jnp.zeros((cout,), F32)}


def init_conv1(cin, cout):
    return {"w": w_init_bf16((cin, cout)), "b": jnp.zeros((cout,), F32)}


def init_linear(din, dout):
    return {"w": w_init_bf16((din, dout)), "b": jnp.zeros((dout,), F32)}


def init_resblock(cin, cout, emb_dim=128):
    p = {"gn1": init_gn(cin), "conv1": init_conv3(cin, cout),
         "emb": init_linear(emb_dim, 2 * cout), "gn2": init_gn(cout),
         "conv2": init_conv3(cout, cout, zero=True)}
    if cin != cout:
        p["skip"] = init_conv1(cin, cout)
    return p


def init_attn(qdim, ctxdim, inner):
    return {"wq": w_init_bf16((qdim, inner)), "wk": w_init_bf16((ctxdim, inner)),
            "wv": w_init_bf16((ctxdim, inner)), "wo": w_init_bf16((inner, qdim)),
            "bo": jnp.zeros((qdim,), F32)}


def init_ff(dim):
    inner = dim * 4
    return {"w1a": w_init_bf16((dim, inner)), "w1g": w_init_bf16((dim, inner)),
            "b1a": jnp.zeros((inner,), F32), "b1g": jnp.zeros((inner,), F32),
            "w2": w_init_bf16((inner, dim)), "b2": jnp.zeros((dim,), F32)}


def init_btb(dim, ctxdim=768):
    return {"ln1": init_gn(dim), "ln2": init_gn(dim), "ln3": init_gn(dim),
            "attn1": init_attn(dim, dim, dim),
            "attn2": init_attn(dim, ctxdim, dim),
            "ff": init_ff(dim)}


def init_st(c):
    return {"norm": init_gn(c), "proj_in": init_conv1(c, c),
            "block": init_btb(c), "proj_out": init_conv1(c, c)}


def init_unet_params():
    p = {}
    p["time1"] = init_linear(128, 128)
    p["time2"] = init_linear(128, 128)
    p["conv2d_1"] = init_conv3(3, 128)
    p["rb1_1"] = init_resblock(128, 128); p["st1_1"] = init_st(128)
    p["rb1_2"] = init_resblock(128, 128); p["st1_2"] = init_st(128)
    p["conv1"] = init_conv3(128, 128)
    p["rb2_1"] = init_resblock(128, 256); p["st2_1"] = init_st(256)
    p["rb2_2"] = init_resblock(256, 256); p["st2_2"] = init_st(256)
    p["conv2"] = init_conv3(256, 256)
    p["rb3_1"] = init_resblock(256, 384); p["st3_1"] = init_st(384)
    p["rb3_2"] = init_resblock(384, 384); p["st3_2"] = init_st(384)
    p["conv3"] = init_conv3(384, 384)
    p["rb4_1"] = init_resblock(384, 512)
    p["rb4_2"] = init_resblock(512, 512)
    p["rb5_1"] = init_resblock(512, 512)
    p["st4_1"] = init_st(512)
    p["rb5_2"] = init_resblock(512 + 512, 512)
    p["rb5_3"] = init_resblock(512 + 384, 512)
    p["up1"] = {"conv": init_conv3(512, 512)}
    p["rb6_1"] = init_resblock(512 + 384, 384); p["st5_1"] = init_st(384)
    p["rb6_2"] = init_resblock(384 + 384, 384); p["st5_2"] = init_st(384)
    p["rb6_3"] = init_resblock(384 + 256, 384); p["st5_3"] = init_st(384)
    p["up2"] = {"conv": init_conv3(384, 384)}
    p["rb7_1"] = init_resblock(384 + 256, 256); p["st6_1"] = init_st(256)
    p["rb7_2"] = init_resblock(256 + 256, 256); p["st6_2"] = init_st(256)
    p["rb7_3"] = init_resblock(256 + 128, 256); p["st6_3"] = init_st(256)
    p["up3"] = {"conv": init_conv3(256, 256)}
    p["rb8_1"] = init_resblock(256 + 128, 128); p["st7_1"] = init_st(128)
    p["rb8_2"] = init_resblock(128 + 128, 128); p["st7_2"] = init_st(128)
    p["rb8_3"] = init_resblock(128 + 128, 128); p["st7_3"] = init_st(128)
    p["out_gn"] = init_gn(128)
    p["out_conv"] = init_conv3(128, 3, zero=True)
    return p


# ----------------------------------------------------------------------------
# Full UNet forward (mirrors UNetModel.forward)
# ----------------------------------------------------------------------------

def unet_forward(params, x_nchw, timesteps, states, cmask):
    # NCHW -> NHWC
    x = jnp.transpose(x_nchw.astype(F32), (0, 2, 3, 1))

    te = timestep_embedding(timesteps, 128)
    temb = matmul(te, params["time1"]["w"], params["time1"]["b"], act="silu")
    temb = matmul(temb, params["time2"]["w"], params["time2"]["b"])
    emb_silu = silu2d(temb)   # ResBlock.emb_layers applies SiLU before its Linear

    hs = []
    x = conv3x3(x, params["conv2d_1"]); hs.append(x)
    x = resblock(params["rb1_1"], x, emb_silu)
    x = spatial_transformer(params["st1_1"], x, states, cmask); hs.append(x)
    x = resblock(params["rb1_2"], x, emb_silu)
    x = spatial_transformer(params["st1_2"], x, states, cmask); hs.append(x)
    x = conv3x3(x, params["conv1"], stride=2); hs.append(x)
    x = resblock(params["rb2_1"], x, emb_silu)
    x = spatial_transformer(params["st2_1"], x, states, cmask); hs.append(x)
    x = resblock(params["rb2_2"], x, emb_silu)
    x = spatial_transformer(params["st2_2"], x, states, cmask); hs.append(x)
    x = conv3x3(x, params["conv2"], stride=2); hs.append(x)
    x = resblock(params["rb3_1"], x, emb_silu)
    x = spatial_transformer(params["st3_1"], x, states, cmask); hs.append(x)
    x = resblock(params["rb3_2"], x, emb_silu)
    x = spatial_transformer(params["st3_2"], x, states, cmask); hs.append(x)
    x = conv3x3(x, params["conv3"], stride=2); hs.append(x)
    x = resblock(params["rb4_1"], x, emb_silu); hs.append(x)
    x = resblock(params["rb4_2"], x, emb_silu); hs.append(x)

    x = resblock(params["rb5_1"], hs.pop(), emb_silu)
    x = spatial_transformer(params["st4_1"], x, states, cmask)
    x = resblock(params["rb5_2"], jnp.concatenate([x, hs.pop()], axis=-1), emb_silu)
    x = resblock(params["rb5_3"], jnp.concatenate([x, hs.pop()], axis=-1), emb_silu)
    x = upsample(params["up1"], x)
    x = resblock(params["rb6_1"], jnp.concatenate([x, hs.pop()], axis=-1), emb_silu)
    x = spatial_transformer(params["st5_1"], x, states, cmask)
    x = resblock(params["rb6_2"], jnp.concatenate([x, hs.pop()], axis=-1), emb_silu)
    x = spatial_transformer(params["st5_2"], x, states, cmask)
    x = resblock(params["rb6_3"], jnp.concatenate([x, hs.pop()], axis=-1), emb_silu)
    x = spatial_transformer(params["st5_3"], x, states, cmask)
    x = upsample(params["up2"], x)
    x = resblock(params["rb7_1"], jnp.concatenate([x, hs.pop()], axis=-1), emb_silu)
    x = spatial_transformer(params["st6_1"], x, states, cmask)
    x = resblock(params["rb7_2"], jnp.concatenate([x, hs.pop()], axis=-1), emb_silu)
    x = spatial_transformer(params["st6_2"], x, states, cmask)
    x = resblock(params["rb7_3"], jnp.concatenate([x, hs.pop()], axis=-1), emb_silu)
    x = spatial_transformer(params["st6_3"], x, states, cmask)
    x = upsample(params["up3"], x)
    x = resblock(params["rb8_1"], jnp.concatenate([x, hs.pop()], axis=-1), emb_silu)
    x = spatial_transformer(params["st7_1"], x, states, cmask)
    x = resblock(params["rb8_2"], jnp.concatenate([x, hs.pop()], axis=-1), emb_silu)
    x = spatial_transformer(params["st7_2"], x, states, cmask)
    x = resblock(params["rb8_3"], jnp.concatenate([x, hs.pop()], axis=-1), emb_silu)
    x = spatial_transformer(params["st7_3"], x, states, cmask)

    x = groupnorm(x, params["out_gn"]["w"], params["out_gn"]["b"],
                  eps=1e-5, silu=True)
    x = conv3x3(x, params["out_conv"])      # zero-init conv -> zeros (as in torch)
    return jnp.transpose(x, (0, 3, 1, 2))   # back to NCHW


# ----------------------------------------------------------------------------
# Demo
# ----------------------------------------------------------------------------

if __name__ == "__main__":
    B, H, W = 1, 16, 16
    T_CTX = 8

    key = jax.random.PRNGKey(0)
    k1, k2 = jax.random.split(key)
    x = jax.random.normal(k1, (B, 3, H, W), F32)
    timesteps = jnp.array([7.0], F32)
    states = jax.random.normal(k2, (B, T_CTX, 768), F32)
    cmask = jnp.ones((B, T_CTX), F32).at[:, -1].set(0.0)   # context['mask']

    params = init_unet_params()
    out = unet_forward(params, x, timesteps, states, cmask)
    out = jax.block_until_ready(out)

    assert out.shape == (B, 3, H, W), out.shape
    assert bool(jnp.all(jnp.isfinite(out)))
    print("KERNEL_OK")
</pallas_src>

<mosaic_0001>
module attributes {stable_mosaic.version = 11 : i64} {
  func.func @_mm_kernel(%arg0: i32, %arg1: i32, %arg2: i32, %arg3: memref<8x128xf32, #tpu.memory_space<vmem>>, %arg4: memref<128x128xbf16, #tpu.memory_space<vmem>>, %arg5: memref<1x128xf32, #tpu.memory_space<vmem>>, %arg6: memref<8x128xf32, #tpu.memory_space<vmem>>, %arg7: memref<8x128xf32, #tpu.memory_space<vmem>>) attributes {dimension_semantics = [#tpu.dimension_semantics<parallel>, #tpu.dimension_semantics<parallel>, #tpu.dimension_semantics<arbitrary>], iteration_bounds = array<i64: 1, 1, 1>, scalar_prefetch = 0 : i64, scratch_operands = 1 : i64, tpu.core_type = #tpu.core_type<tc>, window_params = [{transform_indices = @transform_0, window_bounds = array<i64: 8, 128>}, {transform_indices = @transform_1, window_bounds = array<i64: 128, 128>}, {transform_indices = @transform_2, window_bounds = array<i64: 1, 128>}, {transform_indices = @transform_3, window_bounds = array<i64: 8, 128>}]} {
    %c0_i32 = arith.constant 0 : i32
    %0 = arith.cmpi eq, %arg2, %c0_i32 : i32
    %1 = arith.extui %0 : i1 to i32
    %c0_i32_0 = arith.constant 0 : i32
    %2 = arith.cmpi ne, %1, %c0_i32_0 : i32
    scf.if %2 {
      %cst_10 = arith.constant 0.000000e+00 : f32
      %13 = vector.broadcast %cst_10 : f32 to vector<8x128xf32>
      %c0_11 = arith.constant 0 : index
      %c0_12 = arith.constant 0 : index
      %14 = vector.load %arg7[%c0_11, %c0_12] : memref<8x128xf32, #tpu.memory_space<vmem>>, vector<8x128xf32>
      tpu.vector_store %arg7[%c0_11, %c0_12], %13 {strides = array<i32>} : memref<8x128xf32, #tpu.memory_space<vmem>>, vector<8x128xf32>,
    } else {
    }
    %c0 = arith.constant 0 : index
    %c0_1 = arith.constant 0 : index
    %3 = vector.load %arg7[%c0, %c0_1] : memref<8x128xf32, #tpu.memory_space<vmem>>, vector<8x128xf32>
    %c0_2 = arith.constant 0 : index
    %c0_3 = arith.constant 0 : index
    %4 = vector.load %arg3[%c0_2, %c0_3] : memref<8x128xf32, #tpu.memory_space<vmem>>, vector<8x128xf32>
    %5 = arith.truncf %4 : vector<8x128xf32> to vector<8x128xbf16>
    %c0_4 = arith.constant 0 : index
    %c0_5 = arith.constant 0 : index
    %6 = vector.load %arg4[%c0_4, %c0_5] : memref<128x128xbf16, #tpu.memory_space<vmem>>, vector<128x128xbf16>
    %cst = arith.constant dense<0.000000e+00> : vector<8x128xf32>
    %7 = tpu.matmul %5, %6, %cst {dimension_numbers = #tpu.dot_dimension_numbers<[1], [0], [0], [1], [0, 0, 1, 1], [], []>} : vector<8x128xbf16>, vector<128x128xbf16>, vector<8x128xf32> -> vector<8x128xf32>
    %8 = arith.addf %3, %7 : vector<8x128xf32>
    %c0_6 = arith.constant 0 : index
    %c0_7 = arith.constant 0 : index
    %9 = vector.load %arg7[%c0_6, %c0_7] : memref<8x128xf32, #tpu.memory_space<vmem>>, vector<8x128xf32>
    tpu.vector_store %arg7[%c0_6, %c0_7], %8 {strides = array<i32>} : memref<8x128xf32, #tpu.memory_space<vmem>>, vector<8x128xf32>,
    %c0_i32_8 = arith.constant 0 : i32
    %10 = arith.cmpi eq, %arg2, %c0_i32_8 : i32
    %11 = arith.extui %10 : i1 to i32
    %c0_i32_9 = arith.constant 0 : i32
    %12 = arith.cmpi ne, %11, %c0_i32_9 : i32
    scf.if %12 {
      %c0_10 = arith.constant 0 : index
      %c0_11 = arith.constant 0 : index
      %13 = vector.load %arg7[%c0_10, %c0_11] : memref<8x128xf32, #tpu.memory_space<vmem>>, vector<8x128xf32>
      %c0_12 = arith.constant 0 : index
      %c0_13 = arith.constant 0 : index
      %14 = vector.load %arg5[%c0_12, %c0_13] : memref<1x128xf32, #tpu.memory_space<vmem>>, vector<1x128xf32>
      %15 = vector.broadcast %14 : vector<1x128xf32> to vector<8x128xf32>
      %16 = arith.addf %13, %15 : vector<8x128xf32>
      %cst_14 = arith.constant 0.000000e+00 : f32
      %17 = vector.broadcast %cst_14 : f32 to vector<8x128xf32>
      %18 = arith.subf %17, %16 : vector<8x128xf32>
      %19 = math.exp %18 : vector<8x128xf32>
      %cst_15 = arith.constant 1.000000e+00 : f32
      %20 = vector.broadcast %cst_15 : f32 to vector<8x128xf32>
      %21 = arith.addf %20, %19 : vector<8x128xf32>
      %cst_16 = arith.constant 1.000000e+00 : f32
      %22 = vector.broadcast %cst_16 : f32 to vector<8x128xf32>
      %23 = arith.divf %22, %21 : vector<8x128xf32>
      %24 = arith.mulf %16, %23 : vector<8x128xf32>
      %c0_17 = arith.constant 0 : index
      %c0_18 = arith.constant 0 : index
      %25 = vector.load %arg6[%c0_17, %c0_18] : memref<8x128xf32, #tpu.memory_space<vmem>>, vector<8x128xf32>
      tpu.vector_store %arg6[%c0_17, %c0_18], %24 {strides = array<i32>} : memref<8x128xf32, #tpu.memory_space<vmem>>, vector<8x128xf32>,
    } else {
    }
    return
  }
  func.func @transform_0(%arg0: i32, %arg1: i32, %arg2: i32) -> (i32, i32) {
    %c0_i32 = arith.constant 0 : i32
    return %arg0, %arg2 : i32, i32
  }
  func.func @transform_1(%arg0: i32, %arg1: i32, %arg2: i32) -> (i32, i32) {
    %c0_i32 = arith.constant 0 : i32
    return %arg2, %arg1 : i32, i32
  }
  func.func @transform_2(%arg0: i32, %arg1: i32, %arg2: i32) -> (i32, i32) {
    %c0_i32 = arith.constant 0 : i32
    %c0_i32_0 = arith.constant 0 : i32
    return %c0_i32, %arg1 : i32, i32
  }
  func.func @transform_3(%arg0: i32, %arg1: i32, %arg2: i32) -> (i32, i32) {
    %c0_i32 = arith.constant 0 : i32
    return %arg0, %arg1 : i32, i32
  }
}

</mosaic_0001>

<llo_original>
// kernel: _matmul_impl.1
$region0: #{_matmul_impl.1}
  #allocation0 [shape = 'u32[]', space=smem, size = 0x4, offset = 0x4, fixed_abs, tag = 'smem constant byte address 0x4 - core index']
  #allocation1 [shape = 'u32[144,128]{1,0:T(1,128)}', space=vmem, size = 0x12000, scoped, tag = 'internal scratch']
  #allocation2 [shape = 'f32[8,128]{1,0:T(8,128)}', space=vmem, size = 0x1000, scoped, tag = 'scratch operand']
  %s0 = inlined_call_operand.vmem [shape: f32[8,128], index: 0, kind: input, shape index: {}]
  %s1 = inlined_call_operand.hbm [shape: bf16[128,128], index: 1, kind: input, shape index: {}]
  %s2 = inlined_call_operand.vmem [shape: f32[1,128], index: 2, kind: input, shape index: {}]
  %s3 = inlined_call_operand.vmem [shape: f32[8,128], index: 3, kind: output, shape index: {}]
  %s4 = sld [smem:[#allocation0]]
  $region34: #{_matmul_impl.1} parent=0
    _
  %s6 = ssub.s32 1, %s4
  %s7 = scalar_select 0, %s6, %s4
  $region1: #{_matmul_impl.1} parent=0
    #allocation3 [shape = 'u8[32768]{0}', space=vmem, size = 0x8000, scoped, tag = 'input window, operand 1, single buffered']
    #allocation4 [shape = 's32[1]{0}', space=sflag, size = 0x4, scoped, tag = 'scoped memory for _matmul_impl.1']
    %8 = vsyncpa [#allocation4], 0
    // Predicated region
    $region2: #{_matmul_impl.1} parent=1 // pred_check
      _
    $region3: #{_matmul_impl.1} parent=1 // pred_check_branch
      %10 = sbr.rel (0) target = $region5
    $region4: #{_matmul_impl.1} parent=1 // pred_region
      _
    $region5: #{_matmul_impl.1} parent=1 // pred_fallthru
      _
    // Predicated region
    $region6: #{_matmul_impl.1} parent=1 // pred_check
      _
    $region7: #{_matmul_impl.1} parent=1 // pred_check_branch
      %12 = sbr.rel (0) target = $region9
    $region8: #{_matmul_impl.1} parent=1 // pred_region
      %s14 = ssub.s32 1024, 1024
      %15 = vsyncadd [#allocation4], %s14
      %s16 = sshll.u32 [#allocation3], 4
      %s17 = int_to_ptr.vmem [resolvable:$true] %s16
      %22 = dma.hbm_to_vmem [thread:$0]  %s1, 1024, %s17, [#allocation4], 64, 64, 4
    $region9: #{_matmul_impl.1} parent=1 // pred_fallthru
      _
    // Predicated region
    $region10: #{_matmul_impl.1} parent=1 // pred_check
      _
    $region11: #{_matmul_impl.1} parent=1 // pred_check_branch
      %24 = sbr.rel (0) target = $region13
    $region12: #{_matmul_impl.1} parent=1 // pred_region
      _
    $region13: #{_matmul_impl.1} parent=1 // pred_fallthru
      _
    // Predicated region
    $region14: #{_matmul_impl.1} parent=1 // pred_check
      _
    $region15: #{_matmul_impl.1} parent=1 // pred_check_branch
      %26 = sbr.rel (0) target = $region17
    $region16: #{_matmul_impl.1} parent=1 // pred_region
      %27 = dma.done [#allocation4], 1024
    $region17: #{_matmul_impl.1} parent=1 // pred_fallthru
      _
    %p29 = scmp.eq.s32.totalorder 0, 0
    // Predicated region
    $region18: #{_matmul_impl.1} parent=1 // pred_check
      %p30 = pneg %p29
    $region19: #{_matmul_impl.1} parent=1 // pred_check_branch
      %32 = sbr.rel (%p30) target = $region21
    $region20: #{_matmul_impl.1} parent=1 // pred_region
      %33 = vst [vmem:[#allocation2] sm:$0xff] 0.0
    $region21: #{_matmul_impl.1} parent=1 // pred_fallthru
      _
    %v34 = vld [vmem:[#allocation2] sm:$0xff]
    %v35 = vld [vmem:[%s0] sm:$0xff]
    %v36 = vpack.c.bf16 %v35, %v35
    %v37 = vld [vmem:[#allocation3] sm:$0xf]
    %v38 = vld [vmem:[#allocation3 + $0x4] sm:$0xf]
    %v39 = vld [vmem:[#allocation3 + $0x8] sm:$0xf]
    %v40 = vld [vmem:[#allocation3 + $0xc] sm:$0xf]
    %v41 = vld [vmem:[#allocation3 + $0x10] sm:$0xf]
    %v42 = vld [vmem:[#allocation3 + $0x14] sm:$0xf]
    %v43 = vld [vmem:[#allocation3 + $0x18] sm:$0xf]
    %v44 = vld [vmem:[#allocation3 + $0x1c] sm:$0xf]
    %v45 = vld [vmem:[#allocation3 + $0x20] sm:$0xf]
    %v46 = vld [vmem:[#allocation3 + $0x24] sm:$0xf]
    %v47 = vld [vmem:[#allocation3 + $0x28] sm:$0xf]
    %v48 = vld [vmem:[#allocation3 + $0x2c] sm:$0xf]
    %v49 = vld [vmem:[#allocation3 + $0x30] sm:$0xf]
    %v50 = vld [vmem:[#allocation3 + $0x34] sm:$0xf]
    %v51 = vld [vmem:[#allocation3 + $0x38] sm:$0xf]
    %v52 = vld [vmem:[#allocation3 + $0x3c] sm:$0xf]
    %v69 = vunpack.c.l.b16 %v37
    %v70 = vunpack.c.l.b16 %v38
    %v71 = vunpack.c.l.b16 %v39
    %v72 = vunpack.c.l.b16 %v40
    %v73 = vunpack.c.l.b16 %v41
    %v74 = vunpack.c.l.b16 %v42
    %v75 = vunpack.c.l.b16 %v43
    %v76 = vunpack.c.l.b16 %v44
    %v77 = vunpack.c.l.b16 %v45
    %v78 = vunpack.c.l.b16 %v46
    %v79 = vunpack.c.l.b16 %v47
    %v80 = vunpack.c.l.b16 %v48
    %v81 = vunpack.c.l.b16 %v49
    %v82 = vunpack.c.l.b16 %v50
    %v83 = vunpack.c.l.b16 %v51
    %v84 = vunpack.c.l.b16 %v52
    %v85 = vpack.c.b16 %v70, %v69
    %v86 = vpack.c.b16 %v72, %v71
    %v87 = vpack.c.b16 %v74, %v73
    %v88 = vpack.c.b16 %v76, %v75
    %v89 = vpack.c.b16 %v78, %v77
    %v90 = vpack.c.b16 %v80, %v79
    %v91 = vpack.c.b16 %v82, %v81
    %v92 = vpack.c.b16 %v84, %v83
    %101 = vmatprep.subr.bf16.mxu0 0
    %102 = vmatpush1.bf16.msra.mxu0 %v85
    %103 = vmatprep.subr.bf16.mxu0 0
    %104 = vmatpush1.bf16.msra.mxu0 %v86
    %105 = vmatprep.subr.bf16.mxu0 0
    %106 = vmatpush1.bf16.msra.mxu0 %v87
    %107 = vmatprep.subr.bf16.mxu0 0
    %108 = vmatpush1.bf16.msra.mxu0 %v88
    %109 = vmatprep.subr.bf16.mxu0 0
    %110 = vmatpush1.bf16.msra.mxu0 %v89
    %111 = vmatprep.subr.bf16.mxu0 0
    %112 = vmatpush1.bf16.msra.mxu0 %v90
    %113 = vmatprep.subr.bf16.mxu0 0
    %114 = vmatpush1.bf16.msra.mxu0 %v91
    %115 = vmatprep.subr.bf16.mxu0 0
    %116 = vmatpush1.bf16.msra.mxu0 %v92
    %117 = vmatprep.subr.bf16.mxu0 0
    %118 = vmatpush1.bf16.msra.mxu0 0
    %119 = vmatprep.subr.bf16.mxu0 0
    %120 = vmatpush1.bf16.msra.mxu0 0
    %121 = vmatprep.subr.bf16.mxu0 0
    %122 = vmatpush1.bf16.msra.mxu0 0
    %123 = vmatprep.subr.bf16.mxu0 0
    %124 = vmatpush1.bf16.msra.mxu0 0
    %125 = vmatprep.subr.bf16.mxu0 0
    %126 = vmatpush1.bf16.msra.mxu0 0
    %127 = vmatprep.subr.bf16.mxu0 0
    %128 = vmatpush1.bf16.msra.mxu0 0
    %129 = vmatprep.subr.bf16.mxu0 0
    %130 = vmatpush1.bf16.msra.mxu0 0
    %131 = vmatprep.subr.bf16.mxu0 0
    %132 = vmatpush1.bf16.msra.mxu0 0
    %133 = vmatprep.mubr.bf16.mxu0 0
    %134 = vmatmul.mubr.bf16.gmra.mrb[0].mxu0 %v36
    %v135 = vpop.f32.mrb[0].mxu0
    %v136 = vadd.f32 0.0, %v135
    %v137 = vpop.f32.mrb[0].mxu0
    %v138 = vpop.f32.mrb[0].mxu0
    %v139 = vpop.f32.mrb[0].mxu0
    %140 = vdwg.mxu0
    %v141 = vadd.f32 %v34, %v136
    %142 = vst [vmem:[#allocation2] sm:$0xff] %v141
    // Predicated region
    $region22: #{_matmul_impl.1} parent=1 // pred_check
      %p143 = pneg %p29
    $region23: #{_matmul_impl.1} parent=1 // pred_check_branch
      %145 = sbr.rel (%p143) target = $region25
    $region24: #{_matmul_impl.1} parent=1 // pred_region
      %v146 = vld [vmem:[#allocation2] sm:$0xff]
      %v147 = vld [vmem:[%s2] sm:$0x1]
      %v149 = vlaneseq
      %v150 = vshrl.u32 %v149, 7
      %v151 = vsub.s32 0, %v150
      %v152 = vrot.slane %v147, %v151
      %v154 = vadd.f32 %v146, %v152
      %v155 = vsub.f32 0.0, %v154
      %v156 = vmul.f32 %v155, 1.442695
      %v157 = vpow.pop %v156
      %v158 = vadd.f32 %v157, 1.0
      %v159 = vrcp.pop %v158
      %v160 = vmul.f32 1.0, %v159
      %v161 = vmul.f32 %v154, %v160
      %162 = vst [vmem:[%s3] sm:$0xff] %v161
    $region25: #{_matmul_impl.1} parent=1 // pred_fallthru
      _
    // Predicated region
    $region26: #{_matmul_impl.1} parent=1 // pred_check
      _
    $region27: #{_matmul_impl.1} parent=1 // pred_check_branch
      %164 = sbr.rel (0) target = $region29
    $region28: #{_matmul_impl.1} parent=1 // pred_region
      _
    $region29: #{_matmul_impl.1} parent=1 // pred_fallthru
      _
    // Predicated region
    $region30: #{_matmul_impl.1} parent=1 // pred_check
      _
    $region31: #{_matmul_impl.1} parent=1 // pred_check_branch
      %166 = sbr.rel (0) target = $region33
    $region32: #{_matmul_impl.1} parent=1 // pred_region
      _
    $region33: #{_matmul_impl.1} parent=1 // pred_fallthru
      _
    %167 = vsyncpa [#allocation4], 1

</llo_original>
